<compile_context>
chip_gen: v7x
topology: tpu7x:2x2x1
jax: 0.10.0
libtpu: 0.0.40
codegen_flags: <defaults>
</compile_context>

<pallas_src>
import functools

import jax
import jax.numpy as jnp
from jax import lax
from jax.experimental import pallas as pl
from jax.experimental.pallas import tpu as pltpu


def _round_up(n, m):
    return (n + m - 1) // m * m


def _rnn_kernel(x_ref, wxh_ref, whh_ref, whp_ref, bh_ref, bp_ref,
                out_ref, xh_ref):
    """Single-invocation RNN forward.

    x_ref  : (T*Bp, D)  all time steps, batch-padded, time-major flattened (f32)
    wxh_ref: (D, Hp) f32   whh_ref: (Hp, Hp) bf16   whp_ref: (Hp, Cp) f32
    bh_ref : (1, Hp) f32   bp_ref : (1, Cp) f32
    out_ref: (Bp, Cp) f32  lane-dense logits slab
    xh_ref : VMEM scratch (T*Bp, Hp) f32 holding x @ Wxh + bh for all steps
    """
    n_rows, h_pad = xh_ref.shape
    b_pad = out_ref.shape[0]
    n_steps = n_rows // b_pad            # = T (static)

    # Hoisted input projection with the hidden bias folded in: one MXU pass
    # over all T steps, off the serial dependence chain.
    xh_ref[...] = (jnp.dot(x_ref[...], wxh_ref[...],
                           preferred_element_type=jnp.float32)
                   + bh_ref[...])

    whh = whh_ref[...]                   # bf16, loop-invariant (8 vregs)

    def step(t, h):
        row = pl.multiple_of(t * b_pad, b_pad)      # sublane-aligned start
        xh_t = xh_ref[pl.ds(row, b_pad), :]         # (Bp, Hp) f32
        # bf16 x bf16 -> f32-accumulated single-pass MXU matmul per step.
        hh = jnp.dot(h.astype(jnp.bfloat16), whh,
                     preferred_element_type=jnp.float32)
        return jnp.tanh(xh_t + hh)

    h0 = jnp.zeros((b_pad, h_pad), dtype=jnp.float32)   # h_0 = 0
    unroll = True if n_steps <= 64 else 8
    h_final = lax.fori_loop(0, n_steps, step, h0, unroll=unroll)

    # Output projection; (Bp, Cp) is a lane-dense slab -> unmasked stores.
    logits = jnp.dot(h_final, whp_ref[...],
                     preferred_element_type=jnp.float32) + bp_ref[...]
    out_ref[...] = logits.astype(out_ref.dtype)


def pad_rnn_params(wxh, whh, whp, bh, bp):
    """Pad call-invariant weights once to lane/sublane-aligned tiles.

    Zero padding keeps the math exact: padded hidden columns stay 0 through
    tanh (tanh(0)=0) and padded logit columns are sliced away by the caller.
    Whh is stored in bf16 (MXU recurrent-matmul operand).
    """
    H = wxh.shape[1]
    C = whp.shape[1]
    Hp = _round_up(H, 128)
    Cp = _round_up(C, 128)
    wxh_p = jnp.pad(wxh, ((0, 0), (0, Hp - H))).astype(jnp.float32)
    whh_p = jnp.pad(whh, ((0, Hp - H), (0, Hp - H))).astype(jnp.bfloat16)
    whp_p = jnp.pad(whp, ((0, Hp - H), (0, Cp - C))).astype(jnp.float32)
    bh_p = jnp.pad(bh, (0, Hp - H)).reshape(1, Hp).astype(jnp.float32)
    bp_p = jnp.pad(bp, (0, Cp - C)).reshape(1, Cp).astype(jnp.float32)
    return wxh_p, whh_p, whp_p, bh_p, bp_p


@functools.partial(jax.jit, static_argnames=("num_classes",))
def vanilla_rnn_forward(x, wxh_p, whh_p, whp_p, bh_p, bp_p, *, num_classes):
    """x: (batch, seq_length, input_dim) f32, pre-padded params -> (batch, num_classes)."""
    B, T, D = x.shape
    Hp = wxh_p.shape[1]
    Cp = whp_p.shape[1]
    Bp = _round_up(B, 8)        # sublane alignment

    # Layout plumbing only (per-call data): (B,T,D) -> (T*Bp, D), time-major.
    # Padded batch rows never feed real rows; they are sliced away below.
    x_tbd = jnp.transpose(x, (1, 0, 2))                      # (T, B, D)
    x_tbd = jnp.pad(x_tbd, ((0, 0), (0, Bp - B), (0, 0)))    # (T, Bp, D)
    x_flat = x_tbd.reshape(T * Bp, D).astype(jnp.float32)

    out_pad = pl.pallas_call(
        _rnn_kernel,
        out_shape=jax.ShapeDtypeStruct((Bp, Cp), jnp.float32),
        in_specs=[pl.BlockSpec(memory_space=pltpu.MemorySpace.VMEM)] * 6,
        out_specs=pl.BlockSpec(memory_space=pltpu.MemorySpace.VMEM),
        scratch_shapes=[pltpu.VMEM((T * Bp, Hp), jnp.float32)],
    )(x_flat, wxh_p, whh_p, whp_p, bh_p, bp_p)

    return out_pad[:B, :num_classes]


def vanilla_rnn_reference(x, wxh, whh, whp, bh, bp):
    """Pure-JAX f32 reference matching the PyTorch forward exactly."""
    B, T, D = x.shape
    H = wxh.shape[1]
    h = jnp.zeros((B, H), dtype=jnp.float32)
    for t in range(T):
        xt = x[:, t].reshape(-1, D)
        h = jnp.tanh(xt @ wxh + h @ whh + bh)
    return h @ whp + bp


if __name__ == "__main__":
    # Module hyperparameters (small, consistent with VanillaRNN.__init__/forward).
    seq_length = 8
    input_dim = 4
    num_hidden = 32
    num_classes = 10
    batch_size = 2

    key = jax.random.PRNGKey(0)
    k_x, k_wxh, k_whh, k_whp, k_bh, k_bp = jax.random.split(key, 6)

    std = 1.0 / num_hidden
    wxh = std * jax.random.normal(k_wxh, (input_dim, num_hidden), dtype=jnp.float32)
    whh = std * jax.random.normal(k_whh, (num_hidden, num_hidden), dtype=jnp.float32)
    whp = std * jax.random.normal(k_whp, (num_hidden, num_classes), dtype=jnp.float32)
    bh = std * jax.random.normal(k_bh, (num_hidden,), dtype=jnp.float32)
    bp = std * jax.random.normal(k_bp, (num_classes,), dtype=jnp.float32)

    x = jax.random.normal(k_x, (batch_size, seq_length, input_dim), dtype=jnp.float32)

    # Weights are call-invariant: pad/cast once, outside the per-call path.
    params_padded = pad_rnn_params(wxh, whh, whp, bh, bp)
    params_padded = jax.block_until_ready(params_padded)

    out = vanilla_rnn_forward(x, *params_padded, num_classes=num_classes)
    out = jax.block_until_ready(out)

    ref = vanilla_rnn_reference(x, wxh, whh, whp, bh, bp)
    assert out.shape == (batch_size, num_classes)
    # bf16 recurrent-matmul operands -> loosened tolerance vs the f32 reference.
    assert jnp.allclose(out, ref, atol=1e-2, rtol=1e-2), "Pallas output mismatch vs reference"

    print("KERNEL_OK")
</pallas_src>

<mosaic_0001>
module attributes {stable_mosaic.version = 11 : i64} {
  func.func @_rnn_kernel(%arg0: memref<64x4xf32, #tpu.memory_space<vmem>>, %arg1: memref<4x128xf32, #tpu.memory_space<vmem>>, %arg2: memref<128x128xbf16, #tpu.memory_space<vmem>>, %arg3: memref<128x128xf32, #tpu.memory_space<vmem>>, %arg4: memref<1x128xf32, #tpu.memory_space<vmem>>, %arg5: memref<1x128xf32, #tpu.memory_space<vmem>>, %arg6: memref<8x128xf32, #tpu.memory_space<vmem>>, %arg7: memref<64x128xf32, #tpu.memory_space<vmem>>) attributes {dimension_semantics = [], scalar_prefetch = 0 : i64, scratch_operands = 1 : i64, tpu.core_type = #tpu.core_type<tc>} {
    %c0 = arith.constant 0 : index
    %c0_0 = arith.constant 0 : index
    %0 = vector.load %arg0[%c0, %c0_0] : memref<64x4xf32, #tpu.memory_space<vmem>>, vector<64x4xf32>
    %c0_1 = arith.constant 0 : index
    %c0_2 = arith.constant 0 : index
    %1 = vector.load %arg1[%c0_1, %c0_2] : memref<4x128xf32, #tpu.memory_space<vmem>>, vector<4x128xf32>
    %cst = arith.constant dense<0.000000e+00> : vector<64x128xf32>
    %2 = tpu.matmul %0, %1, %cst {dimension_numbers = #tpu.dot_dimension_numbers<[1], [0], [0], [1], [0, 0, 1, 1], [], []>} : vector<64x4xf32>, vector<4x128xf32>, vector<64x128xf32> -> vector<64x128xf32>
    %c0_3 = arith.constant 0 : index
    %c0_4 = arith.constant 0 : index
    %3 = vector.load %arg4[%c0_3, %c0_4] : memref<1x128xf32, #tpu.memory_space<vmem>>, vector<1x128xf32>
    %4 = vector.broadcast %3 : vector<1x128xf32> to vector<64x128xf32>
    %5 = arith.addf %2, %4 : vector<64x128xf32>
    %c0_5 = arith.constant 0 : index
    %c0_6 = arith.constant 0 : index
    %6 = vector.load %arg7[%c0_5, %c0_6] : memref<64x128xf32, #tpu.memory_space<vmem>>, vector<64x128xf32>
    tpu.vector_store %arg7[%c0_5, %c0_6], %5 {strides = array<i32>} : memref<64x128xf32, #tpu.memory_space<vmem>>, vector<64x128xf32>,
    %c0_7 = arith.constant 0 : index
    %c0_8 = arith.constant 0 : index
    %7 = vector.load %arg2[%c0_7, %c0_8] : memref<128x128xbf16, #tpu.memory_space<vmem>>, vector<128x128xbf16>
    %cst_9 = arith.constant 0.000000e+00 : f32
    %8 = vector.broadcast %cst_9 : f32 to vector<8x128xf32>
    %c0_i32 = arith.constant 0 : i32
    %c8_i32 = arith.constant 8 : i32
    %9 = arith.muli %c0_i32, %c8_i32 : i32
    %10 = tpu.assume_multiple %9, 8 : i32
    %11 = arith.index_cast %10 : i32 to index
    %c0_10 = arith.constant 0 : index
    %12 = vector.load %arg7[%11, %c0_10] : memref<64x128xf32, #tpu.memory_space<vmem>>, vector<8x128xf32>
    %13 = arith.truncf %8 : vector<8x128xf32> to vector<8x128xbf16>
    %cst_11 = arith.constant dense<0.000000e+00> : vector<8x128xf32>
    %14 = tpu.matmul %13, %7, %cst_11 {dimension_numbers = #tpu.dot_dimension_numbers<[1], [0], [0], [1], [0, 0, 1, 1], [], []>} : vector<8x128xbf16>, vector<128x128xbf16>, vector<8x128xf32> -> vector<8x128xf32>
    %15 = arith.addf %12, %14 : vector<8x128xf32>
    %16 = math.tanh %15 : vector<8x128xf32>
    %c1_i32 = arith.constant 1 : i32
    %c8_i32_12 = arith.constant 8 : i32
    %17 = arith.muli %c1_i32, %c8_i32_12 : i32
    %18 = tpu.assume_multiple %17, 8 : i32
    %19 = arith.index_cast %18 : i32 to index
    %c0_13 = arith.constant 0 : index
    %20 = vector.load %arg7[%19, %c0_13] : memref<64x128xf32, #tpu.memory_space<vmem>>, vector<8x128xf32>
    %21 = arith.truncf %16 : vector<8x128xf32> to vector<8x128xbf16>
    %cst_14 = arith.constant dense<0.000000e+00> : vector<8x128xf32>
    %22 = tpu.matmul %21, %7, %cst_14 {dimension_numbers = #tpu.dot_dimension_numbers<[1], [0], [0], [1], [0, 0, 1, 1], [], []>} : vector<8x128xbf16>, vector<128x128xbf16>, vector<8x128xf32> -> vector<8x128xf32>
    %23 = arith.addf %20, %22 : vector<8x128xf32>
    %24 = math.tanh %23 : vector<8x128xf32>
    %c2_i32 = arith.constant 2 : i32
    %c8_i32_15 = arith.constant 8 : i32
    %25 = arith.muli %c2_i32, %c8_i32_15 : i32
    %26 = tpu.assume_multiple %25, 8 : i32
    %27 = arith.index_cast %26 : i32 to index
    %c0_16 = arith.constant 0 : index
    %28 = vector.load %arg7[%27, %c0_16] : memref<64x128xf32, #tpu.memory_space<vmem>>, vector<8x128xf32>
    %29 = arith.truncf %24 : vector<8x128xf32> to vector<8x128xbf16>
    %cst_17 = arith.constant dense<0.000000e+00> : vector<8x128xf32>
    %30 = tpu.matmul %29, %7, %cst_17 {dimension_numbers = #tpu.dot_dimension_numbers<[1], [0], [0], [1], [0, 0, 1, 1], [], []>} : vector<8x128xbf16>, vector<128x128xbf16>, vector<8x128xf32> -> vector<8x128xf32>
    %31 = arith.addf %28, %30 : vector<8x128xf32>
    %32 = math.tanh %31 : vector<8x128xf32>
    %c3_i32 = arith.constant 3 : i32
    %c8_i32_18 = arith.constant 8 : i32
    %33 = arith.muli %c3_i32, %c8_i32_18 : i32
    %34 = tpu.assume_multiple %33, 8 : i32
    %35 = arith.index_cast %34 : i32 to index
    %c0_19 = arith.constant 0 : index
    %36 = vector.load %arg7[%35, %c0_19] : memref<64x128xf32, #tpu.memory_space<vmem>>, vector<8x128xf32>
    %37 = arith.truncf %32 : vector<8x128xf32> to vector<8x128xbf16>
    %cst_20 = arith.constant dense<0.000000e+00> : vector<8x128xf32>
    %38 = tpu.matmul %37, %7, %cst_20 {dimension_numbers = #tpu.dot_dimension_numbers<[1], [0], [0], [1], [0, 0, 1, 1], [], []>} : vector<8x128xbf16>, vector<128x128xbf16>, vector<8x128xf32> -> vector<8x128xf32>
    %39 = arith.addf %36, %38 : vector<8x128xf32>
    %40 = math.tanh %39 : vector<8x128xf32>
    %c4_i32 = arith.constant 4 : i32
    %c8_i32_21 = arith.constant 8 : i32
    %41 = arith.muli %c4_i32, %c8_i32_21 : i32
    %42 = tpu.assume_multiple %41, 8 : i32
    %43 = arith.index_cast %42 : i32 to index
    %c0_22 = arith.constant 0 : index
    %44 = vector.load %arg7[%43, %c0_22] : memref<64x128xf32, #tpu.memory_space<vmem>>, vector<8x128xf32>
    %45 = arith.truncf %40 : vector<8x128xf32> to vector<8x128xbf16>
    %cst_23 = arith.constant dense<0.000000e+00> : vector<8x128xf32>
    %46 = tpu.matmul %45, %7, %cst_23 {dimension_numbers = #tpu.dot_dimension_numbers<[1], [0], [0], [1], [0, 0, 1, 1], [], []>} : vector<8x128xbf16>, vector<128x128xbf16>, vector<8x128xf32> -> vector<8x128xf32>
    %47 = arith.addf %44, %46 : vector<8x128xf32>
    %48 = math.tanh %47 : vector<8x128xf32>
    %c5_i32 = arith.constant 5 : i32
    %c8_i32_24 = arith.constant 8 : i32
    %49 = arith.muli %c5_i32, %c8_i32_24 : i32
    %50 = tpu.assume_multiple %49, 8 : i32
    %51 = arith.index_cast %50 : i32 to index
    %c0_25 = arith.constant 0 : index
    %52 = vector.load %arg7[%51, %c0_25] : memref<64x128xf32, #tpu.memory_space<vmem>>, vector<8x128xf32>
    %53 = arith.truncf %48 : vector<8x128xf32> to vector<8x128xbf16>
    %cst_26 = arith.constant dense<0.000000e+00> : vector<8x128xf32>
    %54 = tpu.matmul %53, %7, %cst_26 {dimension_numbers = #tpu.dot_dimension_numbers<[1], [0], [0], [1], [0, 0, 1, 1], [], []>} : vector<8x128xbf16>, vector<128x128xbf16>, vector<8x128xf32> -> vector<8x128xf32>
    %55 = arith.addf %52, %54 : vector<8x128xf32>
    %56 = math.tanh %55 : vector<8x128xf32>
    %c6_i32 = arith.constant 6 : i32
    %c8_i32_27 = arith.constant 8 : i32
    %57 = arith.muli %c6_i32, %c8_i32_27 : i32
    %58 = tpu.assume_multiple %57, 8 : i32
    %59 = arith.index_cast %58 : i32 to index
    %c0_28 = arith.constant 0 : index
    %60 = vector.load %arg7[%59, %c0_28] : memref<64x128xf32, #tpu.memory_space<vmem>>, vector<8x128xf32>
    %61 = arith.truncf %56 : vector<8x128xf32> to vector<8x128xbf16>
    %cst_29 = arith.constant dense<0.000000e+00> : vector<8x128xf32>
    %62 = tpu.matmul %61, %7, %cst_29 {dimension_numbers = #tpu.dot_dimension_numbers<[1], [0], [0], [1], [0, 0, 1, 1], [], []>} : vector<8x128xbf16>, vector<128x128xbf16>, vector<8x128xf32> -> vector<8x128xf32>
    %63 = arith.addf %60, %62 : vector<8x128xf32>
    %64 = math.tanh %63 : vector<8x128xf32>
    %c7_i32 = arith.constant 7 : i32
    %c8_i32_30 = arith.constant 8 : i32
    %65 = arith.muli %c7_i32, %c8_i32_30 : i32
    %66 = tpu.assume_multiple %65, 8 : i32
    %67 = arith.index_cast %66 : i32 to index
    %c0_31 = arith.constant 0 : index
    %68 = vector.load %arg7[%67, %c0_31] : memref<64x128xf32, #tpu.memory_space<vmem>>, vector<8x128xf32>
    %69 = arith.truncf %64 : vector<8x128xf32> to vector<8x128xbf16>
    %cst_32 = arith.constant dense<0.000000e+00> : vector<8x128xf32>
    %70 = tpu.matmul %69, %7, %cst_32 {dimension_numbers = #tpu.dot_dimension_numbers<[1], [0], [0], [1], [0, 0, 1, 1], [], []>} : vector<8x128xbf16>, vector<128x128xbf16>, vector<8x128xf32> -> vector<8x128xf32>
    %71 = arith.addf %68, %70 : vector<8x128xf32>
    %72 = math.tanh %71 : vector<8x128xf32>
    %c8_i32_33 = arith.constant 8 : i32
    %c0_34 = arith.constant 0 : index
    %c0_35 = arith.constant 0 : index
    %73 = vector.load %arg3[%c0_34, %c0_35] : memref<128x128xf32, #tpu.memory_space<vmem>>, vector<128x128xf32>
    %cst_36 = arith.constant dense<0.000000e+00> : vector<8x128xf32>
    %74 = tpu.matmul %72, %73, %cst_36 {dimension_numbers = #tpu.dot_dimension_numbers<[1], [0], [0], [1], [0, 0, 1, 1], [], []>} : vector<8x128xf32>, vector<128x128xf32>, vector<8x128xf32> -> vector<8x128xf32>
    %c0_37 = arith.constant 0 : index
    %c0_38 = arith.constant 0 : index
    %75 = vector.load %arg5[%c0_37, %c0_38] : memref<1x128xf32, #tpu.memory_space<vmem>>, vector<1x128xf32>
    %76 = vector.broadcast %75 : vector<1x128xf32> to vector<8x128xf32>
    %77 = arith.addf %74, %76 : vector<8x128xf32>
    %c0_39 = arith.constant 0 : index
    %c0_40 = arith.constant 0 : index
    %78 = vector.load %arg6[%c0_39, %c0_40] : memref<8x128xf32, #tpu.memory_space<vmem>>, vector<8x128xf32>
    tpu.vector_store %arg6[%c0_39, %c0_40], %77 {strides = array<i32>} : memref<8x128xf32, #tpu.memory_space<vmem>>, vector<8x128xf32>,
    return
  }
}

</mosaic_0001>

<llo_original>
// kernel: vanilla_rnn_forward.1
$region0: #{vanilla_rnn_forward.1}
  #allocation0 [shape = 'u32[]', space=smem, size = 0x4, offset = 0x4, fixed_abs, tag = 'smem constant byte address 0x4 - core index']
  #allocation1 [shape = 'u32[144,128]{1,0:T(1,128)}', space=vmem, size = 0x12000, scoped, tag = 'internal scratch']
  #allocation2 [shape = 'f32[64,128]{1,0:T(8,128)}', space=vmem, size = 0x8000, scoped, tag = 'scratch operand']
  %s0 = inlined_call_operand.vmem [shape: f32[64,4], index: 0, kind: input, shape index: {}]
  %s1 = inlined_call_operand.vmem [shape: f32[4,128], index: 1, kind: input, shape index: {}]
  %s2 = inlined_call_operand.vmem [shape: bf16[128,128], index: 2, kind: input, shape index: {}]
  %s3 = inlined_call_operand.hbm [shape: f32[128,128], index: 3, kind: input, shape index: {}]
  %s4 = inlined_call_operand.vmem [shape: f32[1,128], index: 4, kind: input, shape index: {}]
  %s5 = inlined_call_operand.vmem [shape: f32[1,128], index: 5, kind: input, shape index: {}]
  %s6 = inlined_call_operand.vmem [shape: f32[8,128], index: 6, kind: output, shape index: {}]
  %s7 = sld [smem:[#allocation0]]
  $region38: #{vanilla_rnn_forward.1} parent=0
    _
  %s9 = ssub.s32 1, %s7
  %s10 = scalar_select 0, %s9, %s7
  $region1: #{vanilla_rnn_forward.1} parent=0
    #allocation3 [shape = 'u8[65536]{0}', space=vmem, size = 0x10000, scoped, tag = 'input window, operand 3, single buffered']
    #allocation4 [shape = 's32[1]{0}', space=sflag, size = 0x4, scoped, tag = 'scoped memory for vanilla_rnn_forward.1']
    %11 = vsyncpa [#allocation4], 0
    // Predicated region
    $region2: #{vanilla_rnn_forward.1} parent=1 // pred_check
      _
    $region3: #{vanilla_rnn_forward.1} parent=1 // pred_check_branch
      %13 = sbr.rel (0) target = $region5
    $region4: #{vanilla_rnn_forward.1} parent=1 // pred_region
      _
    $region5: #{vanilla_rnn_forward.1} parent=1 // pred_fallthru
      _
    // Predicated region
    $region6: #{vanilla_rnn_forward.1} parent=1 // pred_check
      _
    $region7: #{vanilla_rnn_forward.1} parent=1 // pred_check_branch
      %15 = sbr.rel (0) target = $region9
    $region8: #{vanilla_rnn_forward.1} parent=1 // pred_region
      _
    $region9: #{vanilla_rnn_forward.1} parent=1 // pred_fallthru
      _
    // Predicated region
    $region10: #{vanilla_rnn_forward.1} parent=1 // pred_check
      _
    $region11: #{vanilla_rnn_forward.1} parent=1 // pred_check_branch
      %17 = sbr.rel (0) target = $region13
    $region12: #{vanilla_rnn_forward.1} parent=1 // pred_region
      _
    $region13: #{vanilla_rnn_forward.1} parent=1 // pred_fallthru
      _
    // Predicated region
    $region14: #{vanilla_rnn_forward.1} parent=1 // pred_check
      _
    $region15: #{vanilla_rnn_forward.1} parent=1 // pred_check_branch
      %19 = sbr.rel (0) target = $region17
    $region16: #{vanilla_rnn_forward.1} parent=1 // pred_region
      %s21 = ssub.s32 2048, 2048
      %22 = vsyncadd [#allocation4], %s21
      %s23 = sshll.u32 [#allocation3], 4
      %s24 = int_to_ptr.vmem [resolvable:$true] %s23
      %29 = dma.hbm_to_vmem [thread:$0]  %s3, 2048, %s24, [#allocation4], 128, 128, 8
    $region17: #{vanilla_rnn_forward.1} parent=1 // pred_fallthru
      _
    // Predicated region
    $region18: #{vanilla_rnn_forward.1} parent=1 // pred_check
      _
    $region19: #{vanilla_rnn_forward.1} parent=1 // pred_check_branch
      %31 = sbr.rel (0) target = $region21
    $region20: #{vanilla_rnn_forward.1} parent=1 // pred_region
      _
    $region21: #{vanilla_rnn_forward.1} parent=1 // pred_fallthru
      _
    // Predicated region
    $region22: #{vanilla_rnn_forward.1} parent=1 // pred_check
      _
    $region23: #{vanilla_rnn_forward.1} parent=1 // pred_check_branch
      %33 = sbr.rel (0) target = $region25
    $region24: #{vanilla_rnn_forward.1} parent=1 // pred_region
      _
    $region25: #{vanilla_rnn_forward.1} parent=1 // pred_fallthru
      _
    // Predicated region
    $region26: #{vanilla_rnn_forward.1} parent=1 // pred_check
      _
    $region27: #{vanilla_rnn_forward.1} parent=1 // pred_check_branch
      %35 = sbr.rel (0) target = $region29
    $region28: #{vanilla_rnn_forward.1} parent=1 // pred_region
      %36 = dma.done [#allocation4], 2048
    $region29: #{vanilla_rnn_forward.1} parent=1 // pred_fallthru
      _
    %v38 = vld [vmem:[%s0] sm:$0xff]
    %v39 = vld [vmem:[%s0 + $0x8] sm:$0xff]
    %v40 = vld [vmem:[%s0 + $0x10] sm:$0xff]
    %v41 = vld [vmem:[%s0 + $0x18] sm:$0xff]
    %v42 = vld [vmem:[%s0 + $0x20] sm:$0xff]
    %v43 = vld [vmem:[%s0 + $0x28] sm:$0xff]
    %v44 = vld [vmem:[%s0 + $0x30] sm:$0xff]
    %v45 = vld [vmem:[%s0 + $0x38] sm:$0xff]
    %v46 = vld [vmem:[%s1] sm:$0xf]
    %v47 = vld [vmem:[%s4] sm:$0x1]
    %v49 = vlaneseq
    %v50 = vshrl.u32 %v49, 7
    %v51 = vsub.s32 0, %v50
    %v52 = vrot.slane %v47, %v51
    %vm54 = vcmask 31744
    %v56 = vsel %vm54, %v38, 0
    %v59 = vsel %vm54, %v39, 0
    %v62 = vsel %vm54, %v40, 0
    %v65 = vsel %vm54, %v41, 0
    %v68 = vsel %vm54, %v42, 0
    %v71 = vsel %vm54, %v43, 0
    %v74 = vsel %vm54, %v44, 0
    %v77 = vsel %vm54, %v45, 0
    %vm79 = vcmask 1043456
    %v81 = vsel %vm79, %v46, 0
    %83 = vmatprep.subr.mxu0 0.0
    %84 = vmatpush1.msra.mxu0 %v81
    %85 = vmatprep.subr.mxu0 0.0
    %86 = vmatpush1.msra.mxu0 0.0
    %87 = vmatprep.subr.mxu0 0.0
    %88 = vmatpush1.msra.mxu0 0.0
    %89 = vmatprep.subr.mxu0 0.0
    %90 = vmatpush1.msra.mxu0 0.0
    %91 = vmatprep.subr.mxu0 0.0
    %92 = vmatpush1.msra.mxu0 0.0
    %93 = vmatprep.subr.mxu0 0.0
    %94 = vmatpush1.msra.mxu0 0.0
    %95 = vmatprep.subr.mxu0 0.0
    %96 = vmatpush1.msra.mxu0 0.0
    %97 = vmatprep.subr.mxu0 0.0
    %98 = vmatpush1.msra.mxu0 0.0
    %99 = vmatprep.subr.mxu0 0.0
    %100 = vmatpush1.msra.mxu0 0.0
    %101 = vmatprep.subr.mxu0 0.0
    %102 = vmatpush1.msra.mxu0 0.0
    %103 = vmatprep.subr.mxu0 0.0
    %104 = vmatpush1.msra.mxu0 0.0
    %105 = vmatprep.subr.mxu0 0.0
    %106 = vmatpush1.msra.mxu0 0.0
    %107 = vmatprep.subr.mxu0 0.0
    %108 = vmatpush1.msra.mxu0 0.0
    %109 = vmatprep.subr.mxu0 0.0
    %110 = vmatpush1.msra.mxu0 0.0
    %111 = vmatprep.subr.mxu0 0.0
    %112 = vmatpush1.msra.mxu0 0.0
    %113 = vmatprep.subr.mxu0 0.0
    %114 = vmatpush1.msra.mxu0 0.0
    %115 = vmatprep.subr.mxu0 0.0
    %116 = vmatpush1.msra.mxu0 0.0
    %117 = vmatprep.subr.mxu0 0.0
    %118 = vmatpush1.msra.mxu0 0.0
    %119 = vmatprep.subr.mxu0 0.0
    %120 = vmatpush1.msra.mxu0 0.0
    %121 = vmatprep.subr.mxu0 0.0
    %122 = vmatpush1.msra.mxu0 0.0
    %123 = vmatprep.subr.mxu0 0.0
    %124 = vmatpush1.msra.mxu0 0.0
    %125 = vmatprep.subr.mxu0 0.0
    %126 = vmatpush1.msra.mxu0 0.0
    %127 = vmatprep.subr.mxu0 0.0
    %128 = vmatpush1.msra.mxu0 0.0
    %129 = vmatprep.subr.mxu0 0.0
    %130 = vmatpush1.msra.mxu0 0.0
    %131 = vmatprep.subr.mxu0 0.0
    %132 = vmatpush1.msra.mxu0 0.0
    %133 = vmatprep.subr.mxu0 0.0
    %134 = vmatpush1.msra.mxu0 0.0
    %135 = vmatprep.subr.mxu0 0.0
    %136 = vmatpush1.msra.mxu0 0.0
    %137 = vmatprep.subr.mxu0 0.0
    %138 = vmatpush1.msra.mxu0 0.0
    %139 = vmatprep.subr.mxu0 0.0
    %140 = vmatpush1.msra.mxu0 0.0
    %141 = vmatprep.subr.mxu0 0.0
    %142 = vmatpush1.msra.mxu0 0.0
    %143 = vmatprep.subr.mxu0 0.0
    %144 = vmatpush1.msra.mxu0 0.0
    %145 = vmatprep.subr.mxu0 0.0
    %146 = vmatpush1.msra.mxu0 0.0
    %147 = vmatprep.mubr.f32.mxu0 0.0
    %148 = vmatmul.mubr.f32.gmra.mrb[0].mxu0 %v56
    %v149 = vpop.f32.mrb[0].mxu0
    %v150 = vadd.f32 %v52, %v149
    %v151 = vpop.f32.mrb[0].mxu0
    %152 = vmatprep.mubr.f32.mxu0 0.0
    %153 = vmatmul.mubr.f32.gmra.mrb[0].mxu0 %v59
    %v154 = vpop.f32.mrb[0].mxu0
    %v155 = vadd.f32 %v52, %v154
    %v156 = vpop.f32.mrb[0].mxu0
    %157 = vmatprep.mubr.f32.mxu0 0.0
    %158 = vmatmul.mubr.f32.gmra.mrb[0].mxu0 %v62
    %v159 = vpop.f32.mrb[0].mxu0
    %v160 = vadd.f32 %v52, %v159
    %v161 = vpop.f32.mrb[0].mxu0
    %162 = vmatprep.mubr.f32.mxu0 0.0
    %163 = vmatmul.mubr.f32.gmra.mrb[0].mxu0 %v65
    %v164 = vpop.f32.mrb[0].mxu0
    %v165 = vadd.f32 %v52, %v164
    %v166 = vpop.f32.mrb[0].mxu0
    %167 = vmatprep.mubr.f32.mxu0 0.0
    %168 = vmatmul.mubr.f32.gmra.mrb[0].mxu0 %v68
    %v169 = vpop.f32.mrb[0].mxu0
    %v170 = vadd.f32 %v52, %v169
    %v171 = vpop.f32.mrb[0].mxu0
    %172 = vmatprep.mubr.f32.mxu0 0.0
    %173 = vmatmul.mubr.f32.gmra.mrb[0].mxu0 %v71
    %v174 = vpop.f32.mrb[0].mxu0
    %v175 = vadd.f32 %v52, %v174
    %v176 = vpop.f32.mrb[0].mxu0
    %177 = vmatprep.mubr.f32.mxu0 0.0
    %178 = vmatmul.mubr.f32.gmra.mrb[0].mxu0 %v74
    %v179 = vpop.f32.mrb[0].mxu0
    %v180 = vadd.f32 %v52, %v179
    %v181 = vpop.f32.mrb[0].mxu0
    %182 = vmatprep.mubr.f32.mxu0 0.0
    %183 = vmatmul.mubr.f32.gmra.mrb[0].mxu0 %v77
    %v184 = vpop.f32.mrb[0].mxu0
    %v185 = vadd.f32 %v52, %v184
    %v186 = vpop.f32.mrb[0].mxu0
    %187 = vdwg.mxu0
    %188 = vst [vmem:[#allocation2] sm:$0xff] %v150
    %189 = vst [vmem:[#allocation2 + $0x8] sm:$0xff] %v155
    %190 = vst [vmem:[#allocation2 + $0x10] sm:$0xff] %v160
    %191 = vst [vmem:[#allocation2 + $0x18] sm:$0xff] %v165
    %192 = vst [vmem:[#allocation2 + $0x20] sm:$0xff] %v170
    %193 = vst [vmem:[#allocation2 + $0x28] sm:$0xff] %v175
    %194 = vst [vmem:[#allocation2 + $0x30] sm:$0xff] %v180
    %195 = vst [vmem:[#allocation2 + $0x38] sm:$0xff] %v185
    %v196 = vld [vmem:[%s2] sm:$0xf]
    %v197 = vld [vmem:[%s2 + $0x4] sm:$0xf]
    %v198 = vld [vmem:[%s2 + $0x8] sm:$0xf]
    %v199 = vld [vmem:[%s2 + $0xc] sm:$0xf]
    %v200 = vld [vmem:[%s2 + $0x10] sm:$0xf]
    %v201 = vld [vmem:[%s2 + $0x14] sm:$0xf]
    %v202 = vld [vmem:[%s2 + $0x18] sm:$0xf]
    %v203 = vld [vmem:[%s2 + $0x1c] sm:$0xf]
    %v204 = vld [vmem:[%s2 + $0x20] sm:$0xf]
    %v205 = vld [vmem:[%s2 + $0x24] sm:$0xf]
    %v206 = vld [vmem:[%s2 + $0x28] sm:$0xf]
    %v207 = vld [vmem:[%s2 + $0x2c] sm:$0xf]
    %v208 = vld [vmem:[%s2 + $0x30] sm:$0xf]
    %v209 = vld [vmem:[%s2 + $0x34] sm:$0xf]
    %v210 = vld [vmem:[%s2 + $0x38] sm:$0xf]
    %v211 = vld [vmem:[%s2 + $0x3c] sm:$0xf]
    %v212 = vld [vmem:[#allocation2] sm:$0xff]
    %v229 = vunpack.c.l.b16 %v196
    %v230 = vunpack.c.l.b16 %v197
    %v231 = vunpack.c.l.b16 %v198
    %v232 = vunpack.c.l.b16 %v199
    %v233 = vunpack.c.l.b16 %v200
    %v234 = vunpack.c.l.b16 %v201
    %v235 = vunpack.c.l.b16 %v202
    %v236 = vunpack.c.l.b16 %v203
    %v237 = vunpack.c.l.b16 %v204
    %v238 = vunpack.c.l.b16 %v205
    %v239 = vunpack.c.l.b16 %v206
    %v240 = vunpack.c.l.b16 %v207
    %v241 = vunpack.c.l.b16 %v208
    %v242 = vunpack.c.l.b16 %v209
    %v243 = vunpack.c.l.b16 %v210
    %v244 = vunpack.c.l.b16 %v211
    %v245 = vpack.c.b16 %v230, %v229
    %v246 = vpack.c.b16 %v232, %v231
    %v247 = vpack.c.b16 %v234, %v233
    %v248 = vpack.c.b16 %v236, %v235
    %v249 = vpack.c.b16 %v238, %v237
    %v250 = vpack.c.b16 %v240, %v239
    %v251 = vpack.c.b16 %v242, %v241
    %v252 = vpack.c.b16 %v244, %v243
    %261 = vmatprep.subr.bf16.mxu0 0
    %262 = vmatpush1.bf16.msra.mxu0 %v245
    %263 = vmatprep.subr.bf16.mxu0 0
    %264 = vmatpush1.bf16.msra.mxu0 %v246
    %265 = vmatprep.subr.bf16.mxu0 0
    %266 = vmatpush1.bf16.msra.mxu0 %v247
    %267 = vmatprep.subr.bf16.mxu0 0
    %268 = vmatpush1.bf16.msra.mxu0 %v248
    %269 = vmatprep.subr.bf16.mxu0 0
    %270 = vmatpush1.bf16.msra.mxu0 %v249
    %271 = vmatprep.subr.bf16.mxu0 0
    %272 = vmatpush1.bf16.msra.mxu0 %v250
    %273 = vmatprep.subr.bf16.mxu0 0
    %274 = vmatpush1.bf16.msra.mxu0 %v251
    %275 = vmatprep.subr.bf16.mxu0 0
    %276 = vmatpush1.bf16.msra.mxu0 %v252
    %277 = vmatprep.subr.bf16.mxu0 0
    %278 = vmatpush1.bf16.msra.mxu0 0
    %279 = vmatprep.subr.bf16.mxu0 0
    %280 = vmatpush1.bf16.msra.mxu0 0
    %281 = vmatprep.subr.bf16.mxu0 0
    %282 = vmatpush1.bf16.msra.mxu0 0
    %283 = vmatprep.subr.bf16.mxu0 0
    %284 = vmatpush1.bf16.msra.mxu0 0
    %285 = vmatprep.subr.bf16.mxu0 0
    %286 = vmatpush1.bf16.msra.mxu0 0
    %287 = vmatprep.subr.bf16.mxu0 0
    %288 = vmatpush1.bf16.msra.mxu0 0
    %289 = vmatprep.subr.bf16.mxu0 0
    %290 = vmatpush1.bf16.msra.mxu0 0
    %291 = vmatprep.subr.bf16.mxu0 0
    %292 = vmatpush1.bf16.msra.mxu0 0
    %293 = vmatprep.mubr.bf16.mxu0 0
    %294 = vmatmul.mubr.bf16.gmra.mrb[0].mxu0 0
    %v295 = vpop.f32.mrb[0].mxu0
    %v296 = vadd.f32 0.0, %v295
    %v297 = vpop.f32.mrb[0].mxu0
    %v298 = vpop.f32.mrb[0].mxu0
    %v299 = vpop.f32.mrb[0].mxu0
    %300 = vdwg.mxu0
    %v301 = vadd.f32 %v212, %v296
    %v302 = vtanh.pop %v301
    %s303 = scalar_lea.vmem [#allocation2], 8
    %v304 = vld [vmem:[%s303] sm:$0xff]
    %v305 = vpack.c.bf16 %v302, %v302
    %306 = vmatprep.subr.bf16.mxu0 0
    %307 = vmatpush1.bf16.msra.mxu0 %v245
    %308 = vmatprep.subr.bf16.mxu0 0
    %309 = vmatpush1.bf16.msra.mxu0 %v246
    %310 = vmatprep.subr.bf16.mxu0 0
    %311 = vmatpush1.bf16.msra.mxu0 %v247
    %312 = vmatprep.subr.bf16.mxu0 0
    %313 = vmatpush1.bf16.msra.mxu0 %v248
    %314 = vmatprep.subr.bf16.mxu0 0
    %315 = vmatpush1.bf16.msra.mxu0 %v249
    %316 = vmatprep.subr.bf16.mxu0 0
    %317 = vmatpush1.bf16.msra.mxu0 %v250
    %318 = vmatprep.subr.bf16.mxu0 0
    %319 = vmatpush1.bf16.msra.mxu0 %v251
    %320 = vmatprep.subr.bf16.mxu0 0
    %321 = vmatpush1.bf16.msra.mxu0 %v252
    %322 = vmatprep.subr.bf16.mxu0 0
    %323 = vmatpush1.bf16.msra.mxu0 0
    %324 = vmatprep.subr.bf16.mxu0 0
    %325 = vmatpush1.bf16.msra.mxu0 0
    %326 = vmatprep.subr.bf16.mxu0 0
    %327 = vmatpush1.bf16.msra.mxu0 0
    %328 = vmatprep.subr.bf16.mxu0 0
    %329 = vmatpush1.bf16.msra.mxu0 0
    %330 = vmatprep.subr.bf16.mxu0 0
    %331 = vmatpush1.bf16.msra.mxu0 0
    %332 = vmatprep.subr.bf16.mxu0 0
    %333 = vmatpush1.bf16.msra.mxu0 0
    %334 = vmatprep.subr.bf16.mxu0 0
    %335 = vmatpush1.bf16.msra.mxu0 0
    %336 = vmatprep.subr.bf16.mxu0 0
    %337 = vmatpush1.bf16.msra.mxu0 0
    %338 = vmatprep.mubr.bf16.mxu0 0
    %339 = vmatmul.mubr.bf16.gmra.mrb[0].mxu0 %v305
    %v340 = vpop.f32.mrb[0].mxu0
    %v341 = vadd.f32 0.0, %v340
    %v342 = vpop.f32.mrb[0].mxu0
    %v343 = vpop.f32.mrb[0].mxu0
    %v344 = vpop.f32.mrb[0].mxu0
    %345 = vdwg.mxu0
    %v346 = vadd.f32 %v304, %v341
    %v347 = vtanh.pop %v346
    %s348 = scalar_lea.vmem [#allocation2], 16
    %v349 = vld [vmem:[%s348] sm:$0xff]
    %v350 = vpack.c.bf16 %v347, %v347
    %351 = vmatprep.subr.bf16.mxu0 0
    %352 = vmatpush1.bf16.msra.mxu0 %v245
    %353 = vmatprep.subr.bf16.mxu0 0
    %354 = vmatpush1.bf16.msra.mxu0 %v246
    %355 = vmatprep.subr.bf16.mxu0 0
    %356 = vmatpush1.bf16.msra.mxu0 %v247
    %357 = vmatprep.subr.bf16.mxu0 0
    %358 = vmatpush1.bf16.msra.mxu0 %v248
    %359 = vmatprep.subr.bf16.mxu0 0
    %360 = vmatpush1.bf16.msra.mxu0 %v249
    %361 = vmatprep.subr.bf16.mxu0 0
    %362 = vmatpush1.bf16.msra.mxu0 %v250
    %363 = vmatprep.subr.bf16.mxu0 0
    %364 = vmatpush1.bf16.msra.mxu0 %v251
    %365 = vmatprep.subr.bf16.mxu0 0
    %366 = vmatpush1.bf16.msra.mxu0 %v252
    %367 = vmatprep.subr.bf16.mxu0 0
    %368 = vmatpush1.bf16.msra.mxu0 0
    %369 = vmatprep.subr.bf16.mxu0 0
    %370 = vmatpush1.bf16.msra.mxu0 0
    %371 = vmatprep.subr.bf16.mxu0 0
    %372 = vmatpush1.bf16.msra.mxu0 0
    %373 = vmatprep.subr.bf16.mxu0 0
    %374 = vmatpush1.bf16.msra.mxu0 0
    %375 = vmatprep.subr.bf16.mxu0 0
    %376 = vmatpush1.bf16.msra.mxu0 0
    %377 = vmatprep.subr.bf16.mxu0 0
    %378 = vmatpush1.bf16.msra.mxu0 0
    %379 = vmatprep.subr.bf16.mxu0 0
    %380 = vmatpush1.bf16.msra.mxu0 0
    %381 = vmatprep.subr.bf16.mxu0 0
    %382 = vmatpush1.bf16.msra.mxu0 0
    %383 = vmatprep.mubr.bf16.mxu0 0
    %384 = vmatmul.mubr.bf16.gmra.mrb[0].mxu0 %v350
    %v385 = vpop.f32.mrb[0].mxu0
    %v386 = vadd.f32 0.0, %v385
    %v387 = vpop.f32.mrb[0].mxu0
    %v388 = vpop.f32.mrb[0].mxu0
    %v389 = vpop.f32.mrb[0].mxu0
    %390 = vdwg.mxu0
    %v391 = vadd.f32 %v349, %v386
    %v392 = vtanh.pop %v391
    %s393 = scalar_lea.vmem [#allocation2], 24
    %v394 = vld [vmem:[%s393] sm:$0xff]
    %v395 = vpack.c.bf16 %v392, %v392
    %396 = vmatprep.subr.bf16.mxu0 0
    %397 = vmatpush1.bf16.msra.mxu0 %v245
    %398 = vmatprep.subr.bf16.mxu0 0
    %399 = vmatpush1.bf16.msra.mxu0 %v246
    %400 = vmatprep.subr.bf16.mxu0 0
    %401 = vmatpush1.bf16.msra.mxu0 %v247
    %402 = vmatprep.subr.bf16.mxu0 0
    %403 = vmatpush1.bf16.msra.mxu0 %v248
    %404 = vmatprep.subr.bf16.mxu0 0
    %405 = vmatpush1.bf16.msra.mxu0 %v249
    %406 = vmatprep.subr.bf16.mxu0 0
    %407 = vmatpush1.bf16.msra.mxu0 %v250
    %408 = vmatprep.subr.bf16.mxu0 0
    %409 = vmatpush1.bf16.msra.mxu0 %v251
    %410 = vmatprep.subr.bf16.mxu0 0
    %411 = vmatpush1.bf16.msra.mxu0 %v252
    %412 = vmatprep.subr.bf16.mxu0 0
    %413 = vmatpush1.bf16.msra.mxu0 0
    %414 = vmatprep.subr.bf16.mxu0 0
    %415 = vmatpush1.bf16.msra.mxu0 0
    %416 = vmatprep.subr.bf16.mxu0 0
    %417 = vmatpush1.bf16.msra.mxu0 0
    %418 = vmatprep.subr.bf16.mxu0 0
    %419 = vmatpush1.bf16.msra.mxu0 0
    %420 = vmatprep.subr.bf16.mxu0 0
    %421 = vmatpush1.bf16.msra.mxu0 0
    %422 = vmatprep.subr.bf16.mxu0 0
    %423 = vmatpush1.bf16.msra.mxu0 0
    %424 = vmatprep.subr.bf16.mxu0 0
    %425 = vmatpush1.bf16.msra.mxu0 0
    %426 = vmatprep.subr.bf16.mxu0 0
    %427 = vmatpush1.bf16.msra.mxu0 0
    %428 = vmatprep.mubr.bf16.mxu0 0
    %429 = vmatmul.mubr.bf16.gmra.mrb[0].mxu0 %v395
    %v430 = vpop.f32.mrb[0].mxu0
    %v431 = vadd.f32 0.0, %v430
    %v432 = vpop.f32.mrb[0].mxu0
    %v433 = vpop.f32.mrb[0].mxu0
    %v434 = vpop.f32.mrb[0].mxu0
    %435 = vdwg.mxu0
    %v436 = vadd.f32 %v394, %v431
    %v437 = vtanh.pop %v436
    %s438 = scalar_lea.vmem [#allocation2], 32
    %v439 = vld [vmem:[%s438] sm:$0xff]
    %v440 = vpack.c.bf16 %v437, %v437
    %441 = vmatprep.subr.bf16.mxu0 0
    %442 = vmatpush1.bf16.msra.mxu0 %v245
    %443 = vmatprep.subr.bf16.mxu0 0
    %444 = vmatpush1.bf16.msra.mxu0 %v246
    %445 = vmatprep.subr.bf16.mxu0 0
    %446 = vmatpush1.bf16.msra.mxu0 %v247
    %447 = vmatprep.subr.bf16.mxu0 0
    %448 = vmatpush1.bf16.msra.mxu0 %v248
    %449 = vmatprep.subr.bf16.mxu0 0
    %450 = vmatpush1.bf16.msra.mxu0 %v249
    %451 = vmatprep.subr.bf16.mxu0 0
    %452 = vmatpush1.bf16.msra.mxu0 %v250
    %453 = vmatprep.subr.bf16.mxu0 0
    %454 = vmatpush1.bf16.msra.mxu0 %v251
    %455 = vmatprep.subr.bf16.mxu0 0
    %456 = vmatpush1.bf16.msra.mxu0 %v252
    %457 = vmatprep.subr.bf16.mxu0 0
    %458 = vmatpush1.bf16.msra.mxu0 0
    %459 = vmatprep.subr.bf16.mxu0 0
    %460 = vmatpush1.bf16.msra.mxu0 0
    %461 = vmatprep.subr.bf16.mxu0 0
    %462 = vmatpush1.bf16.msra.mxu0 0
    %463 = vmatprep.subr.bf16.mxu0 0
    %464 = vmatpush1.bf16.msra.mxu0 0
    %465 = vmatprep.subr.bf16.mxu0 0
    %466 = vmatpush1.bf16.msra.mxu0 0
    %467 = vmatprep.subr.bf16.mxu0 0
    %468 = vmatpush1.bf16.msra.mxu0 0
    %469 = vmatprep.subr.bf16.mxu0 0
    %470 = vmatpush1.bf16.msra.mxu0 0
    %471 = vmatprep.subr.bf16.mxu0 0
    %472 = vmatpush1.bf16.msra.mxu0 0
    %473 = vmatprep.mubr.bf16.mxu0 0
    %474 = vmatmul.mubr.bf16.gmra.mrb[0].mxu0 %v440
    %v475 = vpop.f32.mrb[0].mxu0
    %v476 = vadd.f32 0.0, %v475
    %v477 = vpop.f32.mrb[0].mxu0
    %v478 = vpop.f32.mrb[0].mxu0
    %v479 = vpop.f32.mrb[0].mxu0
    %480 = vdwg.mxu0
    %v481 = vadd.f32 %v439, %v476
    %v482 = vtanh.pop %v481
    %s483 = scalar_lea.vmem [#allocation2], 40
    %v484 = vld [vmem:[%s483] sm:$0xff]
    %v485 = vpack.c.bf16 %v482, %v482
    %486 = vmatprep.subr.bf16.mxu0 0
    %487 = vmatpush1.bf16.msra.mxu0 %v245
    %488 = vmatprep.subr.bf16.mxu0 0
    %489 = vmatpush1.bf16.msra.mxu0 %v246
    %490 = vmatprep.subr.bf16.mxu0 0
    %491 = vmatpush1.bf16.msra.mxu0 %v247
    %492 = vmatprep.subr.bf16.mxu0 0
    %493 = vmatpush1.bf16.msra.mxu0 %v248
    %494 = vmatprep.subr.bf16.mxu0 0
    %495 = vmatpush1.bf16.msra.mxu0 %v249
    %496 = vmatprep.subr.bf16.mxu0 0
    %497 = vmatpush1.bf16.msra.mxu0 %v250
    %498 = vmatprep.subr.bf16.mxu0 0
    %499 = vmatpush1.bf16.msra.mxu0 %v251
    %500 = vmatprep.subr.bf16.mxu0 0
    %501 = vmatpush1.bf16.msra.mxu0 %v252
    %502 = vmatprep.subr.bf16.mxu0 0
    %503 = vmatpush1.bf16.msra.mxu0 0
    %504 = vmatprep.subr.bf16.mxu0 0
    %505 = vmatpush1.bf16.msra.mxu0 0
    %506 = vmatprep.subr.bf16.mxu0 0
    %507 = vmatpush1.bf16.msra.mxu0 0
    %508 = vmatprep.subr.bf16.mxu0 0
    %509 = vmatpush1.bf16.msra.mxu0 0
    %510 = vmatprep.subr.bf16.mxu0 0
    %511 = vmatpush1.bf16.msra.mxu0 0
    %512 = vmatprep.subr.bf16.mxu0 0
    %513 = vmatpush1.bf16.msra.mxu0 0
    %514 = vmatprep.subr.bf16.mxu0 0
    %515 = vmatpush1.bf16.msra.mxu0 0
    %516 = vmatprep.subr.bf16.mxu0 0
    %517 = vmatpush1.bf16.msra.mxu0 0
    %518 = vmatprep.mubr.bf16.mxu0 0
    %519 = vmatmul.mubr.bf16.gmra.mrb[0].mxu0 %v485
    %v520 = vpop.f32.mrb[0].mxu0
    %v521 = vadd.f32 0.0, %v520
    %v522 = vpop.f32.mrb[0].mxu0
    %v523 = vpop.f32.mrb[0].mxu0
    %v524 = vpop.f32.mrb[0].mxu0
    %525 = vdwg.mxu0
    %v526 = vadd.f32 %v484, %v521
    %v527 = vtanh.pop %v526
    %s528 = scalar_lea.vmem [#allocation2], 48
    %v529 = vld [vmem:[%s528] sm:$0xff]
    %v530 = vpack.c.bf16 %v527, %v527
    %531 = vmatprep.subr.bf16.mxu0 0
    %532 = vmatpush1.bf16.msra.mxu0 %v245
    %533 = vmatprep.subr.bf16.mxu0 0
    %534 = vmatpush1.bf16.msra.mxu0 %v246
    %535 = vmatprep.subr.bf16.mxu0 0
    %536 = vmatpush1.bf16.msra.mxu0 %v247
    %537 = vmatprep.subr.bf16.mxu0 0
    %538 = vmatpush1.bf16.msra.mxu0 %v248
    %539 = vmatprep.subr.bf16.mxu0 0
    %540 = vmatpush1.bf16.msra.mxu0 %v249
    %541 = vmatprep.subr.bf16.mxu0 0
    %542 = vmatpush1.bf16.msra.mxu0 %v250
    %543 = vmatprep.subr.bf16.mxu0 0
    %544 = vmatpush1.bf16.msra.mxu0 %v251
    %545 = vmatprep.subr.bf16.mxu0 0
    %546 = vmatpush1.bf16.msra.mxu0 %v252
    %547 = vmatprep.subr.bf16.mxu0 0
    %548 = vmatpush1.bf16.msra.mxu0 0
    %549 = vmatprep.subr.bf16.mxu0 0
    %550 = vmatpush1.bf16.msra.mxu0 0
    %551 = vmatprep.subr.bf16.mxu0 0
    %552 = vmatpush1.bf16.msra.mxu0 0
    %553 = vmatprep.subr.bf16.mxu0 0
    %554 = vmatpush1.bf16.msra.mxu0 0
    %555 = vmatprep.subr.bf16.mxu0 0
    %556 = vmatpush1.bf16.msra.mxu0 0
    %557 = vmatprep.subr.bf16.mxu0 0
    %558 = vmatpush1.bf16.msra.mxu0 0
    %559 = vmatprep.subr.bf16.mxu0 0
    %560 = vmatpush1.bf16.msra.mxu0 0
    %561 = vmatprep.subr.bf16.mxu0 0
    %562 = vmatpush1.bf16.msra.mxu0 0
    %563 = vmatprep.mubr.bf16.mxu0 0
    %564 = vmatmul.mubr.bf16.gmra.mrb[0].mxu0 %v530
    %v565 = vpop.f32.mrb[0].mxu0
    %v566 = vadd.f32 0.0, %v565
    %v567 = vpop.f32.mrb[0].mxu0
    %v568 = vpop.f32.mrb[0].mxu0
    %v569 = vpop.f32.mrb[0].mxu0
    %570 = vdwg.mxu0
    %v571 = vadd.f32 %v529, %v566
    %v572 = vtanh.pop %v571
    %s573 = scalar_lea.vmem [#allocation2], 56
    %v574 = vld [vmem:[%s573] sm:$0xff]
    %v575 = vpack.c.bf16 %v572, %v572
    %576 = vmatprep.subr.bf16.mxu0 0
    %577 = vmatpush1.bf16.msra.mxu0 %v245
    %578 = vmatprep.subr.bf16.mxu0 0
    %579 = vmatpush1.bf16.msra.mxu0 %v246
    %580 = vmatprep.subr.bf16.mxu0 0
    %581 = vmatpush1.bf16.msra.mxu0 %v247
    %582 = vmatprep.subr.bf16.mxu0 0
    %583 = vmatpush1.bf16.msra.mxu0 %v248
    %584 = vmatprep.subr.bf16.mxu0 0
    %585 = vmatpush1.bf16.msra.mxu0 %v249
    %586 = vmatprep.subr.bf16.mxu0 0
    %587 = vmatpush1.bf16.msra.mxu0 %v250
    %588 = vmatprep.subr.bf16.mxu0 0
    %589 = vmatpush1.bf16.msra.mxu0 %v251
    %590 = vmatprep.subr.bf16.mxu0 0
    %591 = vmatpush1.bf16.msra.mxu0 %v252
    %592 = vmatprep.subr.bf16.mxu0 0
    %593 = vmatpush1.bf16.msra.mxu0 0
    %594 = vmatprep.subr.bf16.mxu0 0
    %595 = vmatpush1.bf16.msra.mxu0 0
    %596 = vmatprep.subr.bf16.mxu0 0
    %597 = vmatpush1.bf16.msra.mxu0 0
    %598 = vmatprep.subr.bf16.mxu0 0
    %599 = vmatpush1.bf16.msra.mxu0 0
    %600 = vmatprep.subr.bf16.mxu0 0
    %601 = vmatpush1.bf16.msra.mxu0 0
    %602 = vmatprep.subr.bf16.mxu0 0
    %603 = vmatpush1.bf16.msra.mxu0 0
    %604 = vmatprep.subr.bf16.mxu0 0
    %605 = vmatpush1.bf16.msra.mxu0 0
    %606 = vmatprep.subr.bf16.mxu0 0
    %607 = vmatpush1.bf16.msra.mxu0 0
    %608 = vmatprep.mubr.bf16.mxu0 0
    %609 = vmatmul.mubr.bf16.gmra.mrb[0].mxu0 %v575
    %v610 = vpop.f32.mrb[0].mxu0
    %v611 = vadd.f32 0.0, %v610
    %v612 = vpop.f32.mrb[0].mxu0
    %v613 = vpop.f32.mrb[0].mxu0
    %v614 = vpop.f32.mrb[0].mxu0
    %615 = vdwg.mxu0
    %v616 = vadd.f32 %v574, %v611
    %v617 = vtanh.pop %v616
    %v618 = vld [vmem:[#allocation3] sm:$0xff]
    %v619 = vld [vmem:[#allocation3 + $0x8] sm:$0xff]
    %v620 = vld [vmem:[#allocation3 + $0x10] sm:$0xff]
    %v621 = vld [vmem:[#allocation3 + $0x18] sm:$0xff]
    %v622 = vld [vmem:[#allocation3 + $0x20] sm:$0xff]
    %v623 = vld [vmem:[#allocation3 + $0x28] sm:$0xff]
    %v624 = vld [vmem:[#allocation3 + $0x30] sm:$0xff]
    %v625 = vld [vmem:[#allocation3 + $0x38] sm:$0xff]
    %v626 = vld [vmem:[#allocation3 + $0x40] sm:$0xff]
    %v627 = vld [vmem:[#allocation3 + $0x48] sm:$0xff]
    %v628 = vld [vmem:[#allocation3 + $0x50] sm:$0xff]
    %v629 = vld [vmem:[#allocation3 + $0x58] sm:$0xff]
    %v630 = vld [vmem:[#allocation3 + $0x60] sm:$0xff]
    %v631 = vld [vmem:[#allocation3 + $0x68] sm:$0xff]
    %v632 = vld [vmem:[#allocation3 + $0x70] sm:$0xff]
    %v633 = vld [vmem:[#allocation3 + $0x78] sm:$0xff]
    %v634 = vld [vmem:[%s5] sm:$0x1]
    %v636 = vlaneseq
    %v637 = vshrl.u32 %v636, 7
    %v638 = vsub.s32 0, %v637
    %v639 = vrot.slane %v634, %v638
    %641 = vmatprep.subr.mxu0 0.0
    %642 = vmatpush1.msra.mxu0 %v618
    %643 = vmatprep.subr.mxu0 0.0
    %644 = vmatpush1.msra.mxu0 %v619
    %645 = vmatprep.subr.mxu0 0.0
    %646 = vmatpush1.msra.mxu0 %v620
    %647 = vmatprep.subr.mxu0 0.0
    %648 = vmatpush1.msra.mxu0 %v621
    %649 = vmatprep.subr.mxu0 0.0
    %650 = vmatpush1.msra.mxu0 %v622
    %651 = vmatprep.subr.mxu0 0.0
    %652 = vmatpush1.msra.mxu0 %v623
    %653 = vmatprep.subr.mxu0 0.0
    %654 = vmatpush1.msra.mxu0 %v624
    %655 = vmatprep.subr.mxu0 0.0
    %656 = vmatpush1.msra.mxu0 %v625
    %657 = vmatprep.subr.mxu0 0.0
    %658 = vmatpush1.msra.mxu0 %v626
    %659 = vmatprep.subr.mxu0 0.0
    %660 = vmatpush1.msra.mxu0 %v627
    %661 = vmatprep.subr.mxu0 0.0
    %662 = vmatpush1.msra.mxu0 %v628
    %663 = vmatprep.subr.mxu0 0.0
    %664 = vmatpush1.msra.mxu0 %v629
    %665 = vmatprep.subr.mxu0 0.0
    %666 = vmatpush1.msra.mxu0 %v630
    %667 = vmatprep.subr.mxu0 0.0
    %668 = vmatpush1.msra.mxu0 %v631
    %669 = vmatprep.subr.mxu0 0.0
    %670 = vmatpush1.msra.mxu0 %v632
    %671 = vmatprep.subr.mxu0 0.0
    %672 = vmatpush1.msra.mxu0 %v633
    %673 = vmatprep.subr.mxu0 0.0
    %674 = vmatpush1.msra.mxu0 0.0
    %675 = vmatprep.subr.mxu0 0.0
    %676 = vmatpush1.msra.mxu0 0.0
    %677 = vmatprep.subr.mxu0 0.0
    %678 = vmatpush1.msra.mxu0 0.0
    %679 = vmatprep.subr.mxu0 0.0
    %680 = vmatpush1.msra.mxu0 0.0
    %681 = vmatprep.subr.mxu0 0.0
    %682 = vmatpush1.msra.mxu0 0.0
    %683 = vmatprep.subr.mxu0 0.0
    %684 = vmatpush1.msra.mxu0 0.0
    %685 = vmatprep.subr.mxu0 0.0
    %686 = vmatpush1.msra.mxu0 0.0
    %687 = vmatprep.subr.mxu0 0.0
    %688 = vmatpush1.msra.mxu0 0.0
    %689 = vmatprep.subr.mxu0 0.0
    %690 = vmatpush1.msra.mxu0 0.0
    %691 = vmatprep.subr.mxu0 0.0
    %692 = vmatpush1.msra.mxu0 0.0
    %693 = vmatprep.subr.mxu0 0.0
    %694 = vmatpush1.msra.mxu0 0.0
    %695 = vmatprep.subr.mxu0 0.0
    %696 = vmatpush1.msra.mxu0 0.0
    %697 = vmatprep.subr.mxu0 0.0
    %698 = vmatpush1.msra.mxu0 0.0
    %699 = vmatprep.subr.mxu0 0.0
    %700 = vmatpush1.msra.mxu0 0.0
    %701 = vmatprep.subr.mxu0 0.0
    %702 = vmatpush1.msra.mxu0 0.0
    %703 = vmatprep.subr.mxu0 0.0
    %704 = vmatpush1.msra.mxu0 0.0
    %705 = vmatprep.mubr.f32.mxu0 0.0
    %706 = vmatmul.mubr.f32.gmra.mrb[0].mxu0 %v617
    %v707 = vpop.f32.mrb[0].mxu0
    %v708 = vadd.f32 %v639, %v707
    %v709 = vpop.f32.mrb[0].mxu0
    %710 = vdwg.mxu0
    %711 = vst [vmem:[%s6] sm:$0xff] %v708
    // Predicated region
    $region30: #{vanilla_rnn_forward.1} parent=1 // pred_check
      _
    $region31: #{vanilla_rnn_forward.1} parent=1 // pred_check_branch
      %713 = sbr.rel (0) target = $region33
    $region32: #{vanilla_rnn_forward.1} parent=1 // pred_region
      _
    $region33: #{vanilla_rnn_forward.1} parent=1 // pred_fallthru
      _
    // Predicated region
    $region34: #{vanilla_rnn_forward.1} parent=1 // pred_check
      _
    $region35: #{vanilla_rnn_forward.1} parent=1 // pred_check_branch
      %715 = sbr.rel (0) target = $region37
    $region36: #{vanilla_rnn_forward.1} parent=1 // pred_region
      _
    $region37: #{vanilla_rnn_forward.1} parent=1 // pred_fallthru
      _
    %716 = vsyncpa [#allocation4], 1

</llo_original>
